<compile_context>
chip_gen: v7x
topology: tpu7x:2x2x1
jax: 0.10.0
libtpu: 0.0.40
codegen_flags: <defaults>
</compile_context>

<pallas_src>
import jax
import jax.numpy as jnp
from jax.experimental import pallas as pl
from jax.experimental.pallas import tpu as pltpu


# ---------------------------------------------------------------------------
# Kernel: one (packed) batch tile, fully in VMEM.
# ---------------------------------------------------------------------------
def _autoencoder_kernel(x_ref, w1_ref, b1_ref, w23_ref, b23_ref, w4_ref, b4_ref,
                        o_ref):
    """x:(TB, Dp)  w1:(Dp, Hp) b1:(1, Hp)  w23:(Hp, Hp) b23:(1, Hp)
       w4:(Hp, Dp) b4:(1, Dp)  o:(TB, Dp)   where Dp = R*D_pad, Hp = R*4."""
    x = x_ref[...].astype(jnp.float32)

    # encoder Linear(D, 4) + ReLU        (packed: block-diagonal Linear(R*D, R*4))
    h1 = jnp.dot(x, w1_ref[...], preferred_element_type=jnp.float32) + b1_ref[...]
    h1 = jnp.maximum(h1, 0.0)

    # encoder Linear(4,1) -> decoder Linear(1,4) fused into Linear(4,4) + ReLU
    h2 = jnp.dot(h1, w23_ref[...], preferred_element_type=jnp.float32) + b23_ref[...]
    h2 = jnp.maximum(h2, 0.0)

    # decoder Linear(4, D)               (packed: block-diagonal Linear(R*4, R*D))
    out = jnp.dot(h2, w4_ref[...], preferred_element_type=jnp.float32) + b4_ref[...]
    o_ref[...] = out.astype(o_ref.dtype)


# ---------------------------------------------------------------------------
# Wrapper helpers
# ---------------------------------------------------------------------------
def _round_up(x, m):
    return ((x + m - 1) // m) * m


def _next_pow2(n):
    return 1 if n <= 1 else 1 << (n - 1).bit_length()


def _block_diag(w, r):
    """(a, b) -> (r*a, r*b) block-diagonal with r copies of w on the diagonal."""
    a, b = w.shape
    eye = jnp.eye(r, dtype=w.dtype)
    return (eye[:, None, :, None] * w[None, :, None, :]).reshape(r * a, r * b)


def _tpu_caps():
    """(vmem_capacity_bytes, tensorcores_per_chip) with conservative fallbacks."""
    vmem_bytes = 64 * 1024 * 1024   # conservative (v7x) default
    num_cores = 1
    try:
        info = pltpu.get_tpu_info()
        vmem_bytes = int(getattr(info, "vmem_capacity_bytes", vmem_bytes))
        for name in ("num_cores", "core_count", "tensorcores_per_chip",
                     "num_tensorcores"):
            v = getattr(info, name, None)
            if isinstance(v, int) and v > 0:
                num_cores = v
                break
    except Exception:
        pass
    return vmem_bytes, num_cores


def autoencoder_forward(x, params, *, batch_tile=4096):
    """x: (B, D) float32 or bfloat16.  params: (in,out) weights & (1,out) biases."""
    B, D = x.shape
    out_dtype = x.dtype
    itemsize = jnp.dtype(x.dtype).itemsize

    w1, b1 = params["w1"], params["b1"]   # (D, 4), (1, 4)
    w2, b2 = params["w2"], params["b2"]   # (4, 1), (1, 1)
    w3, b3 = params["w3"], params["b3"]   # (1, 4), (1, 4)
    w4, b4 = params["w4"], params["b4"]   # (4, D), (1, D)

    # Fuse the two middle Linears (no nonlinearity between them) -> exact.
    w23 = w2 @ w3                          # (4, 4)
    b23 = b2 @ w3 + b3                     # (1, 4)

    # ---- lane-dense layout --------------------------------------------------
    if D % 128 == 0:
        D_pad, R = D, 1
    elif D < 128:
        D_pad = _next_pow2(D)              # power of two <= 128 -> divides 128
        R = 128 // D_pad
    else:
        D_pad = _round_up(D, 128)
        R = 1
    Dp, Hp = R * D_pad, R * 4

    if D_pad != D:
        w1 = jnp.pad(w1, ((0, D_pad - D), (0, 0)))
        w4 = jnp.pad(w4, ((0, 0), (0, D_pad - D)))
        b4 = jnp.pad(b4, ((0, 0), (0, D_pad - D)))
        x = jnp.pad(x, ((0, 0), (0, D_pad - D)))

    if R > 1:
        w1p, w23p, w4p = _block_diag(w1, R), _block_diag(w23, R), _block_diag(w4, R)
        b1p, b23p, b4p = jnp.tile(b1, (1, R)), jnp.tile(b23, (1, R)), jnp.tile(b4, (1, R))
    else:
        w1p, w23p, w4p = w1, w23, w4
        b1p, b23p, b4p = b1, b23, b4

    # ---- hardware-aware batch tiling (packed rows) ---------------------------
    vmem_bytes, num_cores = _tpu_caps()
    if vmem_bytes >= 96 * 1024 * 1024:     # v5e / v6e (128 MiB physical VMEM)
        pipe_budget = 48 * 1024 * 1024
        vmem_limit = 64 * 1024 * 1024
    else:                                  # v7x (64 MiB physical VMEM)
        pipe_budget = 20 * 1024 * 1024
        vmem_limit = 32 * 1024 * 1024

    # VMEM bytes per packed row: double-buffered in/out pipeline buffers plus
    # in-kernel f32 temporaries (upcast x, f32 out before store, h1, h2).
    per_row = Dp * 2 * (itemsize + itemsize)        # 2x (in tile + out tile)
    per_row += 2 * Dp * 4 + 2 * Hp * 4              # f32 temporaries

    Bp = -(-B // R)                                  # packed rows needed
    tb = max(8, (int(batch_tile) // 8) * 8)          # multiple of 8 sublanes
    max_tb = max(8, (pipe_budget // per_row) // 8 * 8)
    tb = min(tb, max_tb, _round_up(Bp, 8))

    if num_cores > 1:
        # Multi-TC chip (v7x): target >= 2 grid steps per TensorCore so both
        # cores get work AND prefetch/writeback overlap, but keep each step
        # moving >= ~1 MiB so per-step overhead stays amortized.
        target_steps = 2 * num_cores
        min_traffic_tb = _round_up(-(-(1 * 1024 * 1024) // (Dp * 2 * itemsize)), 8)
        want_tb = max(8, min_traffic_tb, _round_up(-(-Bp // target_steps), 8))
        tb = max(8, min(tb, want_tb))
    # Single-TC chips (v5e/v6e): grid is a serial loop -> keep one maximal tile.

    Bp_pad = _round_up(max(Bp, tb), tb)
    grid_steps = Bp_pad // tb

    # ---- pad & pack x ---------------------------------------------------------
    B_total = Bp_pad * R
    if B_total != B:
        x = jnp.pad(x, ((0, B_total - B), (0, 0)))
    xp = x.reshape(Bp_pad, Dp)

    # ---- advisory cost estimate (mem-bound) -----------------------------------
    param_bytes = 4 * (w1p.size + w23p.size + w4p.size
                       + b1p.size + b23p.size + b4p.size)
    cost = pl.CostEstimate(
        flops=2 * Bp_pad * (Dp * Hp + Hp * Hp + Hp * Dp),
        transcendentals=0,
        bytes_accessed=2 * Bp_pad * Dp * itemsize + param_bytes,
    )

    full2d = lambda a: pl.BlockSpec(a.shape, lambda i: (0, 0))

    out_packed = pl.pallas_call(
        _autoencoder_kernel,
        out_shape=jax.ShapeDtypeStruct((Bp_pad, Dp), out_dtype),
        grid_spec=pltpu.PrefetchScalarGridSpec(
            num_scalar_prefetch=0,
            grid=(grid_steps,),
            in_specs=[
                pl.BlockSpec((tb, Dp), lambda i: (i, 0)),     # x (packed)
                full2d(w1p), full2d(b1p),
                full2d(w23p), full2d(b23p),
                full2d(w4p), full2d(b4p),
            ],
            out_specs=pl.BlockSpec((tb, Dp), lambda i: (i, 0)),
        ),
        compiler_params=pltpu.CompilerParams(
            dimension_semantics=("parallel",),
            vmem_limit_bytes=vmem_limit,
        ),
        cost_estimate=cost,
    )(xp, w1p, b1p, w23p, b23p, w4p, b4p)

    return out_packed.reshape(B_total, D_pad)[:B, :D]


# ---------------------------------------------------------------------------
# Params + pure-JAX reference (PyTorch semantics)
# ---------------------------------------------------------------------------
def init_params(key, input_dim):
    """PyTorch-style init: U(-1/sqrt(fan_in), 1/sqrt(fan_in)).
    Weights stored as (in_features, out_features); biases as (1, out_features)."""
    def linear(key, fan_in, fan_out):
        kw, kb = jax.random.split(key)
        bound = 1.0 / jnp.sqrt(float(fan_in))
        w = jax.random.uniform(kw, (fan_in, fan_out), jnp.float32, -bound, bound)
        b = jax.random.uniform(kb, (1, fan_out), jnp.float32, -bound, bound)
        return w, b

    k1, k2, k3, k4 = jax.random.split(key, 4)
    w1, b1 = linear(k1, input_dim, 4)   # encoder Linear(input_dim, 4)
    w2, b2 = linear(k2, 4, 1)           # encoder Linear(4, 1)
    w3, b3 = linear(k3, 1, 4)           # decoder Linear(1, 4)
    w4, b4 = linear(k4, 4, input_dim)   # decoder Linear(4, input_dim)
    return dict(w1=w1, b1=b1, w2=w2, b2=b2, w3=w3, b3=b3, w4=w4, b4=b4)


def reference_forward(x, p):
    h1 = jnp.maximum(x @ p["w1"] + p["b1"], 0.0)
    z = h1 @ p["w2"] + p["b2"]
    h2 = jnp.maximum(z @ p["w3"] + p["b3"], 0.0)
    return h2 @ p["w4"] + p["b4"]


if __name__ == "__main__":
    key = jax.random.PRNGKey(0)
    kx, kp, kx2 = jax.random.split(key, 3)

    # Case 1: D divides 128 -> lane-dense row packing (R = 4).
    batch, input_dim = 64, 32
    x = jax.random.normal(kx, (batch, input_dim), jnp.float32)
    params = init_params(kp, input_dim)
    out = jax.block_until_ready(autoencoder_forward(x, params))
    ref = reference_forward(x, params)
    assert out.shape == (batch, input_dim)
    assert jnp.allclose(out, ref, atol=1e-4, rtol=1e-4), "mismatch vs reference (D=32)"

    # Case 2: D not a divisor of 128 -> feature padding path (48 -> 64, R = 2).
    batch2, input_dim2 = 10, 48
    x2 = jax.random.normal(kx2, (batch2, input_dim2), jnp.float32)
    params2 = init_params(jax.random.PRNGKey(1), input_dim2)
    out2 = jax.block_until_ready(autoencoder_forward(x2, params2))
    ref2 = reference_forward(x2, params2)
    assert out2.shape == (batch2, input_dim2)
    assert jnp.allclose(out2, ref2, atol=1e-4, rtol=1e-4), "mismatch vs reference (D=48)"

    print("KERNEL_OK")
</pallas_src>

<mosaic_0001>
module attributes {stable_mosaic.version = 11 : i64} {
  func.func @_autoencoder_kernel(%arg0: i32, %arg1: memref<16x128xf32, #tpu.memory_space<vmem>>, %arg2: memref<128x16xf32, #tpu.memory_space<vmem>>, %arg3: memref<1x16xf32, #tpu.memory_space<vmem>>, %arg4: memref<16x16xf32, #tpu.memory_space<vmem>>, %arg5: memref<1x16xf32, #tpu.memory_space<vmem>>, %arg6: memref<16x128xf32, #tpu.memory_space<vmem>>, %arg7: memref<1x128xf32, #tpu.memory_space<vmem>>, %arg8: memref<16x128xf32, #tpu.memory_space<vmem>>) attributes {dimension_semantics = [#tpu.dimension_semantics<parallel>], iteration_bounds = array<i64: 1>, scalar_prefetch = 0 : i64, scratch_operands = 0 : i64, tpu.core_type = #tpu.core_type<tc>, window_params = [{transform_indices = @transform_0, window_bounds = array<i64: 16, 128>}, {pipeline_mode = #tpu.pipeline_mode<synchronous>, transform_indices = @transform_1, window_bounds = array<i64: 128, 16>}, {pipeline_mode = #tpu.pipeline_mode<synchronous>, transform_indices = @transform_2, window_bounds = array<i64: 1, 16>}, {pipeline_mode = #tpu.pipeline_mode<synchronous>, transform_indices = @transform_3, window_bounds = array<i64: 16, 16>}, {pipeline_mode = #tpu.pipeline_mode<synchronous>, transform_indices = @transform_4, window_bounds = array<i64: 1, 16>}, {pipeline_mode = #tpu.pipeline_mode<synchronous>, transform_indices = @transform_5, window_bounds = array<i64: 16, 128>}, {pipeline_mode = #tpu.pipeline_mode<synchronous>, transform_indices = @transform_6, window_bounds = array<i64: 1, 128>}, {transform_indices = @transform_7, window_bounds = array<i64: 16, 128>}]} {
    %c0 = arith.constant 0 : index
    %c0_0 = arith.constant 0 : index
    %0 = vector.load %arg1[%c0, %c0_0] : memref<16x128xf32, #tpu.memory_space<vmem>>, vector<16x128xf32>
    %c0_1 = arith.constant 0 : index
    %c0_2 = arith.constant 0 : index
    %1 = vector.load %arg2[%c0_1, %c0_2] : memref<128x16xf32, #tpu.memory_space<vmem>>, vector<128x16xf32>
    %cst = arith.constant dense<0.000000e+00> : vector<16x16xf32>
    %2 = tpu.matmul %0, %1, %cst {dimension_numbers = #tpu.dot_dimension_numbers<[1], [0], [0], [1], [0, 0, 1, 1], [], []>} : vector<16x128xf32>, vector<128x16xf32>, vector<16x16xf32> -> vector<16x16xf32>
    %c0_3 = arith.constant 0 : index
    %c0_4 = arith.constant 0 : index
    %3 = vector.load %arg3[%c0_3, %c0_4] : memref<1x16xf32, #tpu.memory_space<vmem>>, vector<1x16xf32>
    %4 = vector.broadcast %3 : vector<1x16xf32> to vector<16x16xf32>
    %5 = arith.addf %2, %4 : vector<16x16xf32>
    %cst_5 = arith.constant 0.000000e+00 : f32
    %6 = vector.broadcast %cst_5 : f32 to vector<16x16xf32>
    %7 = arith.maximumf %5, %6 : vector<16x16xf32>
    %c0_6 = arith.constant 0 : index
    %c0_7 = arith.constant 0 : index
    %8 = vector.load %arg4[%c0_6, %c0_7] : memref<16x16xf32, #tpu.memory_space<vmem>>, vector<16x16xf32>
    %cst_8 = arith.constant dense<0.000000e+00> : vector<16x16xf32>
    %9 = tpu.matmul %7, %8, %cst_8 {dimension_numbers = #tpu.dot_dimension_numbers<[1], [0], [0], [1], [0, 0, 1, 1], [], []>} : vector<16x16xf32>, vector<16x16xf32>, vector<16x16xf32> -> vector<16x16xf32>
    %c0_9 = arith.constant 0 : index
    %c0_10 = arith.constant 0 : index
    %10 = vector.load %arg5[%c0_9, %c0_10] : memref<1x16xf32, #tpu.memory_space<vmem>>, vector<1x16xf32>
    %11 = vector.broadcast %10 : vector<1x16xf32> to vector<16x16xf32>
    %12 = arith.addf %9, %11 : vector<16x16xf32>
    %cst_11 = arith.constant 0.000000e+00 : f32
    %13 = vector.broadcast %cst_11 : f32 to vector<16x16xf32>
    %14 = arith.maximumf %12, %13 : vector<16x16xf32>
    %c0_12 = arith.constant 0 : index
    %c0_13 = arith.constant 0 : index
    %15 = vector.load %arg6[%c0_12, %c0_13] : memref<16x128xf32, #tpu.memory_space<vmem>>, vector<16x128xf32>
    %cst_14 = arith.constant dense<0.000000e+00> : vector<16x128xf32>
    %16 = tpu.matmul %14, %15, %cst_14 {dimension_numbers = #tpu.dot_dimension_numbers<[1], [0], [0], [1], [0, 0, 1, 1], [], []>} : vector<16x16xf32>, vector<16x128xf32>, vector<16x128xf32> -> vector<16x128xf32>
    %c0_15 = arith.constant 0 : index
    %c0_16 = arith.constant 0 : index
    %17 = vector.load %arg7[%c0_15, %c0_16] : memref<1x128xf32, #tpu.memory_space<vmem>>, vector<1x128xf32>
    %18 = vector.broadcast %17 : vector<1x128xf32> to vector<16x128xf32>
    %19 = arith.addf %16, %18 : vector<16x128xf32>
    %c0_17 = arith.constant 0 : index
    %c0_18 = arith.constant 0 : index
    %20 = vector.load %arg8[%c0_17, %c0_18] : memref<16x128xf32, #tpu.memory_space<vmem>>, vector<16x128xf32>
    tpu.vector_store %arg8[%c0_17, %c0_18], %19 {strides = array<i32>} : memref<16x128xf32, #tpu.memory_space<vmem>>, vector<16x128xf32>,
    return
  }
  func.func @transform_0(%arg0: i32) -> (i32, i32) {
    %c0_i32 = arith.constant 0 : i32
    %c0_i32_0 = arith.constant 0 : i32
    return %arg0, %c0_i32 : i32, i32
  }
  func.func @transform_1(%arg0: i32) -> (i32, i32) {
    %c0_i32 = arith.constant 0 : i32
    %c0_i32_0 = arith.constant 0 : i32
    %c0_i32_1 = arith.constant 0 : i32
    return %c0_i32, %c0_i32_0 : i32, i32
  }
  func.func @transform_2(%arg0: i32) -> (i32, i32) {
    %c0_i32 = arith.constant 0 : i32
    %c0_i32_0 = arith.constant 0 : i32
    %c0_i32_1 = arith.constant 0 : i32
    return %c0_i32, %c0_i32_0 : i32, i32
  }
  func.func @transform_3(%arg0: i32) -> (i32, i32) {
    %c0_i32 = arith.constant 0 : i32
    %c0_i32_0 = arith.constant 0 : i32
    %c0_i32_1 = arith.constant 0 : i32
    return %c0_i32, %c0_i32_0 : i32, i32
  }
  func.func @transform_4(%arg0: i32) -> (i32, i32) {
    %c0_i32 = arith.constant 0 : i32
    %c0_i32_0 = arith.constant 0 : i32
    %c0_i32_1 = arith.constant 0 : i32
    return %c0_i32, %c0_i32_0 : i32, i32
  }
  func.func @transform_5(%arg0: i32) -> (i32, i32) {
    %c0_i32 = arith.constant 0 : i32
    %c0_i32_0 = arith.constant 0 : i32
    %c0_i32_1 = arith.constant 0 : i32
    return %c0_i32, %c0_i32_0 : i32, i32
  }
  func.func @transform_6(%arg0: i32) -> (i32, i32) {
    %c0_i32 = arith.constant 0 : i32
    %c0_i32_0 = arith.constant 0 : i32
    %c0_i32_1 = arith.constant 0 : i32
    return %c0_i32, %c0_i32_0 : i32, i32
  }
  func.func @transform_7(%arg0: i32) -> (i32, i32) {
    %c0_i32 = arith.constant 0 : i32
    %c0_i32_0 = arith.constant 0 : i32
    return %arg0, %c0_i32 : i32, i32
  }
}

</mosaic_0001>

<llo_original>
// kernel: tpu_custom_call.1
$region0: #{tpu_custom_call.1}
  #allocation0 [shape = 'u32[]', space=smem, size = 0x4, offset = 0x4, fixed_abs, tag = 'smem constant byte address 0x4 - core index']
  #allocation1 [shape = 'u32[144,128]{1,0:T(1,128)}', space=vmem, size = 0x12000, scoped, tag = 'internal scratch']
  %s0 = inlined_call_operand.vmem [shape: f32[16,128], index: 0, kind: input, shape index: {}]
  %s1 = inlined_call_operand.vmem [shape: f32[128,16], index: 1, kind: input, shape index: {}]
  %s2 = inlined_call_operand.vmem [shape: f32[1,16], index: 2, kind: input, shape index: {}]
  %s3 = inlined_call_operand.vmem [shape: f32[16,16], index: 3, kind: input, shape index: {}]
  %s4 = inlined_call_operand.vmem [shape: f32[1,16], index: 4, kind: input, shape index: {}]
  %s5 = inlined_call_operand.vmem [shape: f32[16,128], index: 5, kind: input, shape index: {}]
  %s6 = inlined_call_operand.vmem [shape: f32[1,128], index: 6, kind: input, shape index: {}]
  %s7 = inlined_call_operand.hbm [shape: f32[16,128], index: 7, kind: output, shape index: {}]
  %s8 = sld [smem:[#allocation0]]
  $region38: #{tpu_custom_call.1} parent=0
    _
  %s10 = ssub.s32 1, %s8
  %s11 = scalar_select 0, %s10, %s8
  $region1: #{tpu_custom_call.1} parent=0
    #allocation2 [shape = 'u8[8192]{0}', space=vmem, size = 0x2000, scoped, tag = 'output window, operand 0, single buffered']
    #allocation3 [shape = 's32[1]{0}', space=sflag, size = 0x4, scoped, tag = 'scoped memory for tpu_custom_call.1']
    %12 = vsyncpa [#allocation3], 0
    // Predicated region
    $region2: #{tpu_custom_call.1} parent=1 // pred_check
      _
    $region3: #{tpu_custom_call.1} parent=1 // pred_check_branch
      %14 = sbr.rel (0) target = $region5
    $region4: #{tpu_custom_call.1} parent=1 // pred_region
      _
    $region5: #{tpu_custom_call.1} parent=1 // pred_fallthru
      _
    // Predicated region
    $region6: #{tpu_custom_call.1} parent=1 // pred_check
      _
    $region7: #{tpu_custom_call.1} parent=1 // pred_check_branch
      %16 = sbr.rel (0) target = $region9
    $region8: #{tpu_custom_call.1} parent=1 // pred_region
      _
    $region9: #{tpu_custom_call.1} parent=1 // pred_fallthru
      _
    // Predicated region
    $region10: #{tpu_custom_call.1} parent=1 // pred_check
      _
    $region11: #{tpu_custom_call.1} parent=1 // pred_check_branch
      %18 = sbr.rel (0) target = $region13
    $region12: #{tpu_custom_call.1} parent=1 // pred_region
      _
    $region13: #{tpu_custom_call.1} parent=1 // pred_fallthru
      _
    // Predicated region
    $region14: #{tpu_custom_call.1} parent=1 // pred_check
      _
    $region15: #{tpu_custom_call.1} parent=1 // pred_check_branch
      %20 = sbr.rel (0) target = $region17
    $region16: #{tpu_custom_call.1} parent=1 // pred_region
      _
    $region17: #{tpu_custom_call.1} parent=1 // pred_fallthru
      _
    // Predicated region
    $region18: #{tpu_custom_call.1} parent=1 // pred_check
      _
    $region19: #{tpu_custom_call.1} parent=1 // pred_check_branch
      %22 = sbr.rel (0) target = $region21
    $region20: #{tpu_custom_call.1} parent=1 // pred_region
      _
    $region21: #{tpu_custom_call.1} parent=1 // pred_fallthru
      _
    // Predicated region
    $region22: #{tpu_custom_call.1} parent=1 // pred_check
      _
    $region23: #{tpu_custom_call.1} parent=1 // pred_check_branch
      %24 = sbr.rel (0) target = $region25
    $region24: #{tpu_custom_call.1} parent=1 // pred_region
      _
    $region25: #{tpu_custom_call.1} parent=1 // pred_fallthru
      _
    // Predicated region
    $region26: #{tpu_custom_call.1} parent=1 // pred_check
      _
    $region27: #{tpu_custom_call.1} parent=1 // pred_check_branch
      %26 = sbr.rel (0) target = $region29
    $region28: #{tpu_custom_call.1} parent=1 // pred_region
      _
    $region29: #{tpu_custom_call.1} parent=1 // pred_fallthru
      _
    %v27 = vld [vmem:[%s0] sm:$0xff]
    %v28 = vld [vmem:[%s0 + $0x8] sm:$0xff]
    %v29 = vld [vmem:[%s1] sm:$0xff]
    %v30 = vld [vmem:[%s1 + $0x8] sm:$0xff]
    %v31 = vld [vmem:[%s1 + $0x10] sm:$0xff]
    %v32 = vld [vmem:[%s1 + $0x18] sm:$0xff]
    %v33 = vld [vmem:[%s1 + $0x20] sm:$0xff]
    %v34 = vld [vmem:[%s1 + $0x28] sm:$0xff]
    %v35 = vld [vmem:[%s1 + $0x30] sm:$0xff]
    %v36 = vld [vmem:[%s1 + $0x38] sm:$0xff]
    %v37 = vld [vmem:[%s1 + $0x40] sm:$0xff]
    %v38 = vld [vmem:[%s1 + $0x48] sm:$0xff]
    %v39 = vld [vmem:[%s1 + $0x50] sm:$0xff]
    %v40 = vld [vmem:[%s1 + $0x58] sm:$0xff]
    %v41 = vld [vmem:[%s1 + $0x60] sm:$0xff]
    %v42 = vld [vmem:[%s1 + $0x68] sm:$0xff]
    %v43 = vld [vmem:[%s1 + $0x70] sm:$0xff]
    %v44 = vld [vmem:[%s1 + $0x78] sm:$0xff]
    %v45 = vld [vmem:[%s2] sm:$0x1]
    %v47 = vlaneseq
    %v48 = vshrl.u32 %v47, 7
    %v49 = vsub.s32 0, %v48
    %v50 = vrot.slane %v45, %v49
    %52 = vmatprep.subr.mxu0 0.0
    %53 = vmatpush1.msra.mxu0 %v29
    %54 = vmatprep.subr.mxu0 0.0
    %55 = vmatpush1.msra.mxu0 %v30
    %56 = vmatprep.subr.mxu0 0.0
    %57 = vmatpush1.msra.mxu0 %v31
    %58 = vmatprep.subr.mxu0 0.0
    %59 = vmatpush1.msra.mxu0 %v32
    %60 = vmatprep.subr.mxu0 0.0
    %61 = vmatpush1.msra.mxu0 %v33
    %62 = vmatprep.subr.mxu0 0.0
    %63 = vmatpush1.msra.mxu0 %v34
    %64 = vmatprep.subr.mxu0 0.0
    %65 = vmatpush1.msra.mxu0 %v35
    %66 = vmatprep.subr.mxu0 0.0
    %67 = vmatpush1.msra.mxu0 %v36
    %68 = vmatprep.subr.mxu0 0.0
    %69 = vmatpush1.msra.mxu0 %v37
    %70 = vmatprep.subr.mxu0 0.0
    %71 = vmatpush1.msra.mxu0 %v38
    %72 = vmatprep.subr.mxu0 0.0
    %73 = vmatpush1.msra.mxu0 %v39
    %74 = vmatprep.subr.mxu0 0.0
    %75 = vmatpush1.msra.mxu0 %v40
    %76 = vmatprep.subr.mxu0 0.0
    %77 = vmatpush1.msra.mxu0 %v41
    %78 = vmatprep.subr.mxu0 0.0
    %79 = vmatpush1.msra.mxu0 %v42
    %80 = vmatprep.subr.mxu0 0.0
    %81 = vmatpush1.msra.mxu0 %v43
    %82 = vmatprep.subr.mxu0 0.0
    %83 = vmatpush1.msra.mxu0 %v44
    %84 = vmatprep.subr.mxu0 0.0
    %85 = vmatpush1.msra.mxu0 0.0
    %86 = vmatprep.subr.mxu0 0.0
    %87 = vmatpush1.msra.mxu0 0.0
    %88 = vmatprep.subr.mxu0 0.0
    %89 = vmatpush1.msra.mxu0 0.0
    %90 = vmatprep.subr.mxu0 0.0
    %91 = vmatpush1.msra.mxu0 0.0
    %92 = vmatprep.subr.mxu0 0.0
    %93 = vmatpush1.msra.mxu0 0.0
    %94 = vmatprep.subr.mxu0 0.0
    %95 = vmatpush1.msra.mxu0 0.0
    %96 = vmatprep.subr.mxu0 0.0
    %97 = vmatpush1.msra.mxu0 0.0
    %98 = vmatprep.subr.mxu0 0.0
    %99 = vmatpush1.msra.mxu0 0.0
    %100 = vmatprep.subr.mxu0 0.0
    %101 = vmatpush1.msra.mxu0 0.0
    %102 = vmatprep.subr.mxu0 0.0
    %103 = vmatpush1.msra.mxu0 0.0
    %104 = vmatprep.subr.mxu0 0.0
    %105 = vmatpush1.msra.mxu0 0.0
    %106 = vmatprep.subr.mxu0 0.0
    %107 = vmatpush1.msra.mxu0 0.0
    %108 = vmatprep.subr.mxu0 0.0
    %109 = vmatpush1.msra.mxu0 0.0
    %110 = vmatprep.subr.mxu0 0.0
    %111 = vmatpush1.msra.mxu0 0.0
    %112 = vmatprep.subr.mxu0 0.0
    %113 = vmatpush1.msra.mxu0 0.0
    %114 = vmatprep.subr.mxu0 0.0
    %115 = vmatpush1.msra.mxu0 0.0
    %116 = vmatprep.mubr.f32.mxu0 0.0
    %117 = vmatmul.mubr.f32.gmra.mrb[0].mxu0 %v27
    %v118 = vpop.f32.mrb[0].mxu0
    %v119 = vadd.f32 %v50, %v118
    %v120 = vpop.f32.mrb[0].mxu0
    %121 = vmatprep.mubr.f32.mxu0 0.0
    %122 = vmatmul.mubr.f32.gmra.mrb[0].mxu0 %v28
    %v123 = vpop.f32.mrb[0].mxu0
    %v124 = vadd.f32 %v50, %v123
    %v125 = vpop.f32.mrb[0].mxu0
    %126 = vdwg.mxu0
    %v127 = vmax.f32 %v119, 0.0
    %v128 = vmax.f32 %v124, 0.0
    %v129 = vld [vmem:[%s3] sm:$0xff]
    %v130 = vld [vmem:[%s3 + $0x8] sm:$0xff]
    %v131 = vld [vmem:[%s4] sm:$0x1]
    %v133 = vlaneseq
    %v134 = vshrl.u32 %v133, 7
    %v135 = vsub.s32 0, %v134
    %v136 = vrot.slane %v131, %v135
    %vm138 = vcmask 130048
    %v140 = vsel %vm138, %v127, 0
    %v143 = vsel %vm138, %v128, 0
    %145 = vmatprep.subr.mxu0 0.0
    %146 = vmatpush1.msra.mxu0 %v129
    %147 = vmatprep.subr.mxu0 0.0
    %148 = vmatpush1.msra.mxu0 %v130
    %149 = vmatprep.subr.mxu0 0.0
    %150 = vmatpush1.msra.mxu0 0.0
    %151 = vmatprep.subr.mxu0 0.0
    %152 = vmatpush1.msra.mxu0 0.0
    %153 = vmatprep.subr.mxu0 0.0
    %154 = vmatpush1.msra.mxu0 0.0
    %155 = vmatprep.subr.mxu0 0.0
    %156 = vmatpush1.msra.mxu0 0.0
    %157 = vmatprep.subr.mxu0 0.0
    %158 = vmatpush1.msra.mxu0 0.0
    %159 = vmatprep.subr.mxu0 0.0
    %160 = vmatpush1.msra.mxu0 0.0
    %161 = vmatprep.subr.mxu0 0.0
    %162 = vmatpush1.msra.mxu0 0.0
    %163 = vmatprep.subr.mxu0 0.0
    %164 = vmatpush1.msra.mxu0 0.0
    %165 = vmatprep.subr.mxu0 0.0
    %166 = vmatpush1.msra.mxu0 0.0
    %167 = vmatprep.subr.mxu0 0.0
    %168 = vmatpush1.msra.mxu0 0.0
    %169 = vmatprep.subr.mxu0 0.0
    %170 = vmatpush1.msra.mxu0 0.0
    %171 = vmatprep.subr.mxu0 0.0
    %172 = vmatpush1.msra.mxu0 0.0
    %173 = vmatprep.subr.mxu0 0.0
    %174 = vmatpush1.msra.mxu0 0.0
    %175 = vmatprep.subr.mxu0 0.0
    %176 = vmatpush1.msra.mxu0 0.0
    %177 = vmatprep.subr.mxu0 0.0
    %178 = vmatpush1.msra.mxu0 0.0
    %179 = vmatprep.subr.mxu0 0.0
    %180 = vmatpush1.msra.mxu0 0.0
    %181 = vmatprep.subr.mxu0 0.0
    %182 = vmatpush1.msra.mxu0 0.0
    %183 = vmatprep.subr.mxu0 0.0
    %184 = vmatpush1.msra.mxu0 0.0
    %185 = vmatprep.subr.mxu0 0.0
    %186 = vmatpush1.msra.mxu0 0.0
    %187 = vmatprep.subr.mxu0 0.0
    %188 = vmatpush1.msra.mxu0 0.0
    %189 = vmatprep.subr.mxu0 0.0
    %190 = vmatpush1.msra.mxu0 0.0
    %191 = vmatprep.subr.mxu0 0.0
    %192 = vmatpush1.msra.mxu0 0.0
    %193 = vmatprep.subr.mxu0 0.0
    %194 = vmatpush1.msra.mxu0 0.0
    %195 = vmatprep.subr.mxu0 0.0
    %196 = vmatpush1.msra.mxu0 0.0
    %197 = vmatprep.subr.mxu0 0.0
    %198 = vmatpush1.msra.mxu0 0.0
    %199 = vmatprep.subr.mxu0 0.0
    %200 = vmatpush1.msra.mxu0 0.0
    %201 = vmatprep.subr.mxu0 0.0
    %202 = vmatpush1.msra.mxu0 0.0
    %203 = vmatprep.subr.mxu0 0.0
    %204 = vmatpush1.msra.mxu0 0.0
    %205 = vmatprep.subr.mxu0 0.0
    %206 = vmatpush1.msra.mxu0 0.0
    %207 = vmatprep.subr.mxu0 0.0
    %208 = vmatpush1.msra.mxu0 0.0
    %209 = vmatprep.mubr.f32.mxu0 0.0
    %210 = vmatmul.mubr.f32.gmra.mrb[0].mxu0 %v140
    %v211 = vpop.f32.mrb[0].mxu0
    %v212 = vadd.f32 %v136, %v211
    %v213 = vpop.f32.mrb[0].mxu0
    %214 = vmatprep.mubr.f32.mxu0 0.0
    %215 = vmatmul.mubr.f32.gmra.mrb[0].mxu0 %v143
    %v216 = vpop.f32.mrb[0].mxu0
    %v217 = vadd.f32 %v136, %v216
    %v218 = vpop.f32.mrb[0].mxu0
    %219 = vdwg.mxu0
    %v220 = vmax.f32 %v212, 0.0
    %v221 = vmax.f32 %v217, 0.0
    %v222 = vld [vmem:[%s5] sm:$0xff]
    %v223 = vld [vmem:[%s5 + $0x8] sm:$0xff]
    %v224 = vld [vmem:[%s6] sm:$0x1]
    %v226 = vlaneseq
    %v227 = vshrl.u32 %v226, 7
    %v228 = vsub.s32 0, %v227
    %v229 = vrot.slane %v224, %v228
    %v232 = vsel %vm138, %v220, 0
    %v235 = vsel %vm138, %v221, 0
    %237 = vmatprep.subr.mxu0 0.0
    %238 = vmatpush1.msra.mxu0 %v222
    %239 = vmatprep.subr.mxu0 0.0
    %240 = vmatpush1.msra.mxu0 %v223
    %241 = vmatprep.subr.mxu0 0.0
    %242 = vmatpush1.msra.mxu0 0.0
    %243 = vmatprep.subr.mxu0 0.0
    %244 = vmatpush1.msra.mxu0 0.0
    %245 = vmatprep.subr.mxu0 0.0
    %246 = vmatpush1.msra.mxu0 0.0
    %247 = vmatprep.subr.mxu0 0.0
    %248 = vmatpush1.msra.mxu0 0.0
    %249 = vmatprep.subr.mxu0 0.0
    %250 = vmatpush1.msra.mxu0 0.0
    %251 = vmatprep.subr.mxu0 0.0
    %252 = vmatpush1.msra.mxu0 0.0
    %253 = vmatprep.subr.mxu0 0.0
    %254 = vmatpush1.msra.mxu0 0.0
    %255 = vmatprep.subr.mxu0 0.0
    %256 = vmatpush1.msra.mxu0 0.0
    %257 = vmatprep.subr.mxu0 0.0
    %258 = vmatpush1.msra.mxu0 0.0
    %259 = vmatprep.subr.mxu0 0.0
    %260 = vmatpush1.msra.mxu0 0.0
    %261 = vmatprep.subr.mxu0 0.0
    %262 = vmatpush1.msra.mxu0 0.0
    %263 = vmatprep.subr.mxu0 0.0
    %264 = vmatpush1.msra.mxu0 0.0
    %265 = vmatprep.subr.mxu0 0.0
    %266 = vmatpush1.msra.mxu0 0.0
    %267 = vmatprep.subr.mxu0 0.0
    %268 = vmatpush1.msra.mxu0 0.0
    %269 = vmatprep.subr.mxu0 0.0
    %270 = vmatpush1.msra.mxu0 0.0
    %271 = vmatprep.subr.mxu0 0.0
    %272 = vmatpush1.msra.mxu0 0.0
    %273 = vmatprep.subr.mxu0 0.0
    %274 = vmatpush1.msra.mxu0 0.0
    %275 = vmatprep.subr.mxu0 0.0
    %276 = vmatpush1.msra.mxu0 0.0
    %277 = vmatprep.subr.mxu0 0.0
    %278 = vmatpush1.msra.mxu0 0.0
    %279 = vmatprep.subr.mxu0 0.0
    %280 = vmatpush1.msra.mxu0 0.0
    %281 = vmatprep.subr.mxu0 0.0
    %282 = vmatpush1.msra.mxu0 0.0
    %283 = vmatprep.subr.mxu0 0.0
    %284 = vmatpush1.msra.mxu0 0.0
    %285 = vmatprep.subr.mxu0 0.0
    %286 = vmatpush1.msra.mxu0 0.0
    %287 = vmatprep.subr.mxu0 0.0
    %288 = vmatpush1.msra.mxu0 0.0
    %289 = vmatprep.subr.mxu0 0.0
    %290 = vmatpush1.msra.mxu0 0.0
    %291 = vmatprep.subr.mxu0 0.0
    %292 = vmatpush1.msra.mxu0 0.0
    %293 = vmatprep.subr.mxu0 0.0
    %294 = vmatpush1.msra.mxu0 0.0
    %295 = vmatprep.subr.mxu0 0.0
    %296 = vmatpush1.msra.mxu0 0.0
    %297 = vmatprep.subr.mxu0 0.0
    %298 = vmatpush1.msra.mxu0 0.0
    %299 = vmatprep.subr.mxu0 0.0
    %300 = vmatpush1.msra.mxu0 0.0
    %301 = vmatprep.mubr.f32.mxu0 0.0
    %302 = vmatmul.mubr.f32.gmra.mrb[0].mxu0 %v232
    %v303 = vpop.f32.mrb[0].mxu0
    %v304 = vadd.f32 %v229, %v303
    %v305 = vpop.f32.mrb[0].mxu0
    %306 = vmatprep.mubr.f32.mxu0 0.0
    %307 = vmatmul.mubr.f32.gmra.mrb[0].mxu0 %v235
    %v308 = vpop.f32.mrb[0].mxu0
    %v309 = vadd.f32 %v229, %v308
    %v310 = vpop.f32.mrb[0].mxu0
    %311 = vdwg.mxu0
    %312 = vst [vmem:[#allocation2] sm:$0xff] %v304
    %313 = vst [vmem:[#allocation2 + $0x8] sm:$0xff] %v309
    // Predicated region
    $region30: #{tpu_custom_call.1} parent=1 // pred_check
      _
    $region31: #{tpu_custom_call.1} parent=1 // pred_check_branch
      %315 = sbr.rel (0) target = $region33
    $region32: #{tpu_custom_call.1} parent=1 // pred_region
      %s317 = ssub.s32 256, 256
      %318 = vsyncadd [#allocation3], %s317
      %s319 = sshll.u32 [#allocation2], 4
      %s320 = int_to_ptr.vmem [resolvable:$true] %s319
      %325 = dma.vmem_to_hbm [thread:$0]  %s320, 256, %s7, [#allocation3], 128, 128, 8
    $region33: #{tpu_custom_call.1} parent=1 // pred_fallthru
      _
    // Predicated region
    $region34: #{tpu_custom_call.1} parent=1 // pred_check
      _
    $region35: #{tpu_custom_call.1} parent=1 // pred_check_branch
      %327 = sbr.rel (0) target = $region37
    $region36: #{tpu_custom_call.1} parent=1 // pred_region
      %328 = dma.done [#allocation3], 256
    $region37: #{tpu_custom_call.1} parent=1 // pred_fallthru
      _
    %329 = vsyncpa [#allocation3], 1

</llo_original>
